<compile_context>
chip_gen: v6e
topology: v6e:2x2x1
jax: 0.10.0
libtpu: 0.0.40
codegen_flags: <defaults>
</compile_context>

<pallas_src>
import functools

import jax
import jax.numpy as jnp
from jax.experimental import pallas as pl
from jax.experimental.pallas import tpu as pltpu


def _round_up(x, m):
    return ((x + m - 1) // m) * m


def _tensorcores_per_chip():
    """2 on v7x (megacore via 'parallel' grid axis), else 1."""
    try:
        kind = jax.devices()[0].device_kind.lower()
        return 2 if ("v7" in kind or "tpu7" in kind) else 1
    except Exception:
        return 1


# --------------------------------------------------------------------------
# Kernel
# --------------------------------------------------------------------------
def controller_kernel(x_ref, wt_ref, bt_ref, wh_ref, bh_ref, mask_ref, out_ref):
    # Fused trunk: [value-trunk | policy-trunk] in ONE K=32 matmul.  (TB, 2*Hp)
    trunk = jnp.dot(x_ref[...], wt_ref[...],
                    preferred_element_type=jnp.float32) + bt_ref[...]
    trunk = jnp.maximum(trunk, 0.0)                       # ReLU for both trunks

    # Fused heads: [alpha_lin | beta_lin | v | pad] in ONE matmul.  (TB, 8)
    heads = jnp.dot(trunk.astype(wh_ref.dtype), wh_ref[...],
                    preferred_element_type=jnp.float32) + bh_ref[...]

    # softplus(x)+1 on the alpha/beta lanes, raw linear on the v lane, selected
    # by a precomputed constant mask (no per-step iota).
    sp = jnp.logaddexp(heads, 0.0) + 1.0
    m = mask_ref[...]
    out_ref[...] = m * sp + (1.0 - m) * heads


# --------------------------------------------------------------------------
# Parameter packing (done once, outside the hot path)
# --------------------------------------------------------------------------
def pack_params(params, compute_dtype=jnp.bfloat16):
    wv1, bv1 = params["wv1"], params["bv1"]   # (D, H), (1, H)
    wv2, bv2 = params["wv2"], params["bv2"]   # (H, 1), (1, 1)
    wfc, bfc = params["wfc"], params["bfc"]   # (D, H), (1, H)
    wa, ba = params["wa"], params["ba"]       # (H, A), (1, A)
    wb, bb = params["wb"], params["bb"]       # (H, A), (1, A)

    D, H = wv1.shape
    A = wa.shape[1]
    Hp = _round_up(H, 128)
    head_w = _round_up(2 * A + 1, 8)          # narrow output slab (>= 2A + 1)

    # Trunk weight (D, 2*Hp): cols [0:Hp] value trunk, [Hp:2Hp] policy trunk.
    w_trunk = jnp.zeros((D, 2 * Hp), jnp.float32)
    w_trunk = w_trunk.at[:, :H].set(wv1)
    w_trunk = w_trunk.at[:, Hp:Hp + H].set(wfc)
    b_trunk = jnp.zeros((1, 2 * Hp), jnp.float32)
    b_trunk = b_trunk.at[:, :H].set(bv1)
    b_trunk = b_trunk.at[:, Hp:Hp + H].set(bfc)

    # Heads weight (2*Hp, head_w):
    #   rows [0:Hp]   (hv) -> col 2A carries wv2
    #   rows [Hp:2Hp] (h)  -> cols [0:A]=wa, [A:2A]=wb
    w_heads = jnp.zeros((2 * Hp, head_w), jnp.float32)
    w_heads = w_heads.at[:H, 2 * A].set(wv2[:, 0])
    w_heads = w_heads.at[Hp:Hp + H, :A].set(wa)
    w_heads = w_heads.at[Hp:Hp + H, A:2 * A].set(wb)
    b_heads = jnp.zeros((1, head_w), jnp.float32)
    b_heads = b_heads.at[:, :A].set(ba)
    b_heads = b_heads.at[:, A:2 * A].set(bb)
    b_heads = b_heads.at[:, 2 * A].set(bv2[0, 0])

    # 1.0 on softplus (alpha/beta) lanes, 0.0 on the v / pad lanes.
    mask = jnp.zeros((1, head_w), jnp.float32).at[:, :2 * A].set(1.0)

    return dict(
        w_trunk=w_trunk.astype(compute_dtype),
        b_trunk=b_trunk,                      # f32 (added after f32 accumulate)
        w_heads=w_heads.astype(compute_dtype),
        b_heads=b_heads,                      # f32
        mask=mask,                            # f32
        actions=A,
        input_size=D,
        compute_dtype=compute_dtype,
    )


# --------------------------------------------------------------------------
# Forward wrapper
# --------------------------------------------------------------------------
def controller_forward(x, packed, *, block_batch=4096):
    """x is the concatenated (B, latents+recurrents) input (== torch.cat(inputs, 1))."""
    B, D = x.shape
    assert D == packed["input_size"]
    A = packed["actions"]
    dtype = packed["compute_dtype"]

    wt, bt = packed["w_trunk"], packed["b_trunk"]
    wh, bh = packed["w_heads"], packed["b_heads"]
    mask = packed["mask"]
    Hp2 = wt.shape[1]                 # 2 * padded hidden
    head_w = wh.shape[1]              # narrow lane-count of output slab

    # TODO(synk): producers should hand x already in compute_dtype (bf16) so
    # this cast is not a separate un-hidden HBM pass.
    if x.dtype != dtype:
        x = x.astype(dtype)

    # Batch tile: multiple of 8 sublanes, large enough to amortize per-step
    # pipeline overhead.  On v7x, make sure both TensorCores get a grid step.
    B8 = _round_up(B, 8)
    tb = min(_round_up(block_batch, 8), B8)
    if _tensorcores_per_chip() >= 2 and tb == B8 and B8 >= 16 and B8 % 16 == 0:
        tb = B8 // 2
    B_pad = _round_up(B, tb)
    if B_pad != B:
        x = jnp.pad(x, ((0, B_pad - B), (0, 0)))

    grid = (B_pad // tb,)

    # VMEM footprint (double-buffered tiles + resident weights) — tiny at the
    # default tb; only raise the scoped limit for very large tiles (v7x: 32 MiB
    # scoped default, 64 MiB physical).
    vmem_bytes = (2 * tb * D * jnp.dtype(dtype).itemsize
                  + 2 * tb * head_w * 4
                  + 2 * (wt.size + wh.size) * jnp.dtype(dtype).itemsize
                  + 2 * (bt.size + bh.size + mask.size) * 4)
    cp = dict(dimension_semantics=("parallel",))
    if vmem_bytes > 24 * 1024 * 1024:
        cp["vmem_limit_bytes"] = min(2 * vmem_bytes, 48 * 1024 * 1024)

    slab = pl.pallas_call(
        controller_kernel,
        out_shape=jax.ShapeDtypeStruct((B_pad, head_w), jnp.float32),
        grid_spec=pltpu.PrefetchScalarGridSpec(
            num_scalar_prefetch=0,
            grid=grid,
            in_specs=[
                pl.BlockSpec((tb, D), lambda i: (i, 0)),          # packed input tile
                pl.BlockSpec((D, Hp2), lambda i: (0, 0)),         # trunk W (resident)
                pl.BlockSpec((1, Hp2), lambda i: (0, 0)),         # trunk bias
                pl.BlockSpec((Hp2, head_w), lambda i: (0, 0)),    # heads W (resident)
                pl.BlockSpec((1, head_w), lambda i: (0, 0)),      # heads bias
                pl.BlockSpec((1, head_w), lambda i: (0, 0)),      # softplus-lane mask
            ],
            out_specs=pl.BlockSpec((tb, head_w), lambda i: (i, 0)),
        ),
        compiler_params=pltpu.CompilerParams(**cp),
    )(x, wt, bt, wh, bh, mask)

    alpha = slab[:B, 0:A]
    beta = slab[:B, A:2 * A]
    v = slab[:B, 2 * A:2 * A + 1]
    return (alpha, beta), v


# --------------------------------------------------------------------------
# Init + pure-JAX reference (for the self-check)
# --------------------------------------------------------------------------
def init_params(key, input_size, hidden, actions):
    """Mimics PyTorch nn.Linear default init (uniform +-1/sqrt(fan_in))."""
    def linear(k, fan_in, fan_out):
        kw, kb = jax.random.split(k)
        bound = 1.0 / jnp.sqrt(jnp.float32(fan_in))
        w = jax.random.uniform(kw, (fan_in, fan_out), jnp.float32, -bound, bound)
        b = jax.random.uniform(kb, (1, fan_out), jnp.float32, -bound, bound)
        return w, b

    keys = jax.random.split(key, 5)
    wv1, bv1 = linear(keys[0], input_size, hidden)
    wv2, bv2 = linear(keys[1], hidden, 1)
    wfc, bfc = linear(keys[2], input_size, hidden)
    wa, ba = linear(keys[3], hidden, actions)
    wb, bb = linear(keys[4], hidden, actions)
    return dict(wv1=wv1, bv1=bv1, wv2=wv2, bv2=bv2,
                wfc=wfc, bfc=bfc, wa=wa, ba=ba, wb=wb, bb=bb)


def reference_forward(latent, recurrent, params):
    x = jnp.concatenate([latent, recurrent], axis=1)
    hv = jnp.maximum(x @ params["wv1"] + params["bv1"], 0.0)
    v = hv @ params["wv2"] + params["bv2"]
    h = jnp.maximum(x @ params["wfc"] + params["bfc"], 0.0)
    alpha = jax.nn.softplus(h @ params["wa"] + params["ba"]) + 1.0
    beta = jax.nn.softplus(h @ params["wb"] + params["bb"]) + 1.0
    return (alpha, beta), v


if __name__ == "__main__":
    # Small shapes consistent with the module: latents=16, recurrents=16, actions=3.
    LATENTS, RECURRENTS, ACTIONS, HIDDEN, BATCH = 16, 16, 3, 100, 8

    key = jax.random.PRNGKey(0)
    k_lat, k_rec, k_par = jax.random.split(key, 3)
    latent = jax.random.normal(k_lat, (BATCH, LATENTS), jnp.float32)
    recurrent = jax.random.normal(k_rec, (BATCH, RECURRENTS), jnp.float32)
    params = init_params(k_par, LATENTS + RECURRENTS, HIDDEN, ACTIONS)

    # torch.cat(inputs, dim=1) — packed once where the inputs are produced.
    x = jnp.concatenate([latent, recurrent], axis=1)

    (alpha_ref, beta_ref), v_ref = reference_forward(latent, recurrent, params)

    # --- f32 path: exact check against the PyTorch-equivalent reference ---
    packed_f32 = pack_params(params, compute_dtype=jnp.float32)
    (alpha, beta), v = controller_forward(x, packed_f32)
    jax.block_until_ready((alpha, beta, v))
    assert alpha.shape == (BATCH, ACTIONS) and beta.shape == (BATCH, ACTIONS)
    assert v.shape == (BATCH, 1)
    assert jnp.allclose(alpha, alpha_ref, atol=1e-5, rtol=1e-5)
    assert jnp.allclose(beta, beta_ref, atol=1e-5, rtol=1e-5)
    assert jnp.allclose(v, v_ref, atol=1e-5, rtol=1e-5)

    # --- bf16 fast path (default): loose tolerance, f32 accumulation kept ---
    packed_bf16 = pack_params(params, compute_dtype=jnp.bfloat16)
    (a16, b16), v16 = controller_forward(x.astype(jnp.bfloat16), packed_bf16)
    jax.block_until_ready((a16, b16, v16))
    assert jnp.allclose(a16, alpha_ref, atol=5e-2, rtol=5e-2)
    assert jnp.allclose(b16, beta_ref, atol=5e-2, rtol=5e-2)
    assert jnp.allclose(v16, v_ref, atol=5e-2, rtol=5e-2)

    print("KERNEL_OK")
</pallas_src>

<mosaic_0001>
module attributes {stable_mosaic.version = 11 : i64} {
  func.func @controller_kernel(%arg0: i32, %arg1: memref<8x32xf32, #tpu.memory_space<vmem>>, %arg2: memref<32x256xf32, #tpu.memory_space<vmem>>, %arg3: memref<1x256xf32, #tpu.memory_space<vmem>>, %arg4: memref<256x8xf32, #tpu.memory_space<vmem>>, %arg5: memref<1x8xf32, #tpu.memory_space<vmem>>, %arg6: memref<1x8xf32, #tpu.memory_space<vmem>>, %arg7: memref<8x8xf32, #tpu.memory_space<vmem>>) attributes {dimension_semantics = [#tpu.dimension_semantics<parallel>], iteration_bounds = array<i64: 1>, scalar_prefetch = 0 : i64, scratch_operands = 0 : i64, tpu.core_type = #tpu.core_type<tc>, window_params = [{transform_indices = @transform_0, window_bounds = array<i64: 8, 32>}, {pipeline_mode = #tpu.pipeline_mode<synchronous>, transform_indices = @transform_1, window_bounds = array<i64: 32, 256>}, {pipeline_mode = #tpu.pipeline_mode<synchronous>, transform_indices = @transform_2, window_bounds = array<i64: 1, 256>}, {pipeline_mode = #tpu.pipeline_mode<synchronous>, transform_indices = @transform_3, window_bounds = array<i64: 256, 8>}, {pipeline_mode = #tpu.pipeline_mode<synchronous>, transform_indices = @transform_4, window_bounds = array<i64: 1, 8>}, {pipeline_mode = #tpu.pipeline_mode<synchronous>, transform_indices = @transform_5, window_bounds = array<i64: 1, 8>}, {transform_indices = @transform_6, window_bounds = array<i64: 8, 8>}]} {
    %c0 = arith.constant 0 : index
    %c0_0 = arith.constant 0 : index
    %0 = vector.load %arg1[%c0, %c0_0] : memref<8x32xf32, #tpu.memory_space<vmem>>, vector<8x32xf32>
    %c0_1 = arith.constant 0 : index
    %c0_2 = arith.constant 0 : index
    %1 = vector.load %arg2[%c0_1, %c0_2] : memref<32x256xf32, #tpu.memory_space<vmem>>, vector<32x256xf32>
    %cst = arith.constant dense<0.000000e+00> : vector<8x256xf32>
    %2 = tpu.matmul %0, %1, %cst {dimension_numbers = #tpu.dot_dimension_numbers<[1], [0], [0], [1], [0, 0, 1, 1], [], []>} : vector<8x32xf32>, vector<32x256xf32>, vector<8x256xf32> -> vector<8x256xf32>
    %c0_3 = arith.constant 0 : index
    %c0_4 = arith.constant 0 : index
    %3 = vector.load %arg3[%c0_3, %c0_4] : memref<1x256xf32, #tpu.memory_space<vmem>>, vector<1x256xf32>
    %4 = vector.broadcast %3 : vector<1x256xf32> to vector<8x256xf32>
    %5 = arith.addf %2, %4 : vector<8x256xf32>
    %cst_5 = arith.constant 0.000000e+00 : f32
    %6 = vector.broadcast %cst_5 : f32 to vector<8x256xf32>
    %7 = arith.maximumf %5, %6 : vector<8x256xf32>
    %c0_6 = arith.constant 0 : index
    %c0_7 = arith.constant 0 : index
    %8 = vector.load %arg4[%c0_6, %c0_7] : memref<256x8xf32, #tpu.memory_space<vmem>>, vector<256x8xf32>
    %cst_8 = arith.constant dense<0.000000e+00> : vector<8x8xf32>
    %9 = tpu.matmul %7, %8, %cst_8 {dimension_numbers = #tpu.dot_dimension_numbers<[1], [0], [0], [1], [0, 0, 1, 1], [], []>} : vector<8x256xf32>, vector<256x8xf32>, vector<8x8xf32> -> vector<8x8xf32>
    %c0_9 = arith.constant 0 : index
    %c0_10 = arith.constant 0 : index
    %10 = vector.load %arg5[%c0_9, %c0_10] : memref<1x8xf32, #tpu.memory_space<vmem>>, vector<1x8xf32>
    %11 = vector.broadcast %10 : vector<1x8xf32> to vector<8x8xf32>
    %12 = arith.addf %9, %11 : vector<8x8xf32>
    %cst_11 = arith.constant 0.000000e+00 : f32
    %13 = vector.broadcast %cst_11 : f32 to vector<8x8xf32>
    %14 = arith.maximumf %12, %13 : vector<8x8xf32>
    %15 = vector.broadcast %cst_11 : f32 to vector<8x8xf32>
    %16 = arith.subf %12, %15 : vector<8x8xf32>
    %17 = arith.cmpf one, %16, %16 : vector<8x8xf32>
    %18 = vector.broadcast %cst_11 : f32 to vector<8x8xf32>
    %19 = arith.addf %12, %18 : vector<8x8xf32>
    %20 = math.absf %16 : vector<8x8xf32>
    %cst_12 = arith.constant 0.000000e+00 : f32
    %21 = vector.broadcast %cst_12 : f32 to vector<8x8xf32>
    %22 = arith.subf %21, %20 : vector<8x8xf32>
    %23 = math.exp %22 : vector<8x8xf32>
    %24 = math.log1p %23 : vector<8x8xf32>
    %25 = arith.addf %14, %24 : vector<8x8xf32>
    %26 = arith.select %17, %19, %25 : vector<8x8xi1>, vector<8x8xf32>
    %cst_13 = arith.constant 1.000000e+00 : f32
    %27 = vector.broadcast %cst_13 : f32 to vector<8x8xf32>
    %28 = arith.addf %26, %27 : vector<8x8xf32>
    %c0_14 = arith.constant 0 : index
    %c0_15 = arith.constant 0 : index
    %29 = vector.load %arg6[%c0_14, %c0_15] : memref<1x8xf32, #tpu.memory_space<vmem>>, vector<1x8xf32>
    %30 = vector.broadcast %29 : vector<1x8xf32> to vector<8x8xf32>
    %31 = arith.mulf %30, %28 : vector<8x8xf32>
    %cst_16 = arith.constant 1.000000e+00 : f32
    %32 = vector.broadcast %cst_16 : f32 to vector<1x8xf32>
    %33 = arith.subf %32, %29 : vector<1x8xf32>
    %34 = vector.broadcast %33 : vector<1x8xf32> to vector<8x8xf32>
    %35 = arith.mulf %34, %12 : vector<8x8xf32>
    %36 = arith.addf %31, %35 : vector<8x8xf32>
    %c0_17 = arith.constant 0 : index
    %c0_18 = arith.constant 0 : index
    %37 = vector.load %arg7[%c0_17, %c0_18] : memref<8x8xf32, #tpu.memory_space<vmem>>, vector<8x8xf32>
    tpu.vector_store %arg7[%c0_17, %c0_18], %36 {strides = array<i32>} : memref<8x8xf32, #tpu.memory_space<vmem>>, vector<8x8xf32>,
    return
  }
  func.func @transform_0(%arg0: i32) -> (i32, i32) {
    %c0_i32 = arith.constant 0 : i32
    %c0_i32_0 = arith.constant 0 : i32
    return %arg0, %c0_i32 : i32, i32
  }
  func.func @transform_1(%arg0: i32) -> (i32, i32) {
    %c0_i32 = arith.constant 0 : i32
    %c0_i32_0 = arith.constant 0 : i32
    %c0_i32_1 = arith.constant 0 : i32
    return %c0_i32, %c0_i32_0 : i32, i32
  }
  func.func @transform_2(%arg0: i32) -> (i32, i32) {
    %c0_i32 = arith.constant 0 : i32
    %c0_i32_0 = arith.constant 0 : i32
    %c0_i32_1 = arith.constant 0 : i32
    return %c0_i32, %c0_i32_0 : i32, i32
  }
  func.func @transform_3(%arg0: i32) -> (i32, i32) {
    %c0_i32 = arith.constant 0 : i32
    %c0_i32_0 = arith.constant 0 : i32
    %c0_i32_1 = arith.constant 0 : i32
    return %c0_i32, %c0_i32_0 : i32, i32
  }
  func.func @transform_4(%arg0: i32) -> (i32, i32) {
    %c0_i32 = arith.constant 0 : i32
    %c0_i32_0 = arith.constant 0 : i32
    %c0_i32_1 = arith.constant 0 : i32
    return %c0_i32, %c0_i32_0 : i32, i32
  }
  func.func @transform_5(%arg0: i32) -> (i32, i32) {
    %c0_i32 = arith.constant 0 : i32
    %c0_i32_0 = arith.constant 0 : i32
    %c0_i32_1 = arith.constant 0 : i32
    return %c0_i32, %c0_i32_0 : i32, i32
  }
  func.func @transform_6(%arg0: i32) -> (i32, i32) {
    %c0_i32 = arith.constant 0 : i32
    %c0_i32_0 = arith.constant 0 : i32
    return %arg0, %c0_i32 : i32, i32
  }
}

</mosaic_0001>

<llo_original>
// kernel: tpu_custom_call.1
$region0: #{tpu_custom_call.1}
  #allocation0 [shape = 'u32[]', space=smem, size = 0x4, offset = 0x4, fixed_abs, tag = 'smem constant byte address 0x4 - core index']
  #allocation1 [shape = 'u32[144,128]{1,0:T(1,128)}', space=vmem, size = 0x12000, scoped, tag = 'internal scratch']
  %s0 = inlined_call_operand.vmem [shape: f32[8,32], index: 0, kind: input, shape index: {}]
  %s1 = inlined_call_operand.vmem [shape: f32[32,256], index: 1, kind: input, shape index: {}]
  %s2 = inlined_call_operand.vmem [shape: f32[1,256], index: 2, kind: input, shape index: {}]
  %s3 = inlined_call_operand.vmem [shape: f32[256,8], index: 3, kind: input, shape index: {}]
  %s4 = inlined_call_operand.vmem [shape: f32[1,8], index: 4, kind: input, shape index: {}]
  %s5 = inlined_call_operand.vmem [shape: f32[1,8], index: 5, kind: input, shape index: {}]
  %s6 = inlined_call_operand.hbm [shape: f32[8,8], index: 6, kind: output, shape index: {}]
  %s7 = sld [smem:[#allocation0]]
  $region34: #{tpu_custom_call.1} parent=0
    _
  %s9 = ssub.s32 1, %s7
  %s10 = scalar_select 0, %s9, %s7
  $region1: #{tpu_custom_call.1} parent=0
    #allocation2 [shape = 'u8[4096]{0}', space=vmem, size = 0x1000, scoped, tag = 'output window, operand 0, single buffered']
    #allocation3 [shape = 's32[1]{0}', space=sflag, size = 0x4, scoped, tag = 'scoped memory for tpu_custom_call.1']
    %11 = vsyncpa [#allocation3], 0
    // Predicated region
    $region2: #{tpu_custom_call.1} parent=1 // pred_check
      _
    $region3: #{tpu_custom_call.1} parent=1 // pred_check_branch
      %13 = sbr.rel (0) target = $region5
    $region4: #{tpu_custom_call.1} parent=1 // pred_region
      _
    $region5: #{tpu_custom_call.1} parent=1 // pred_fallthru
      _
    // Predicated region
    $region6: #{tpu_custom_call.1} parent=1 // pred_check
      _
    $region7: #{tpu_custom_call.1} parent=1 // pred_check_branch
      %15 = sbr.rel (0) target = $region9
    $region8: #{tpu_custom_call.1} parent=1 // pred_region
      _
    $region9: #{tpu_custom_call.1} parent=1 // pred_fallthru
      _
    // Predicated region
    $region10: #{tpu_custom_call.1} parent=1 // pred_check
      _
    $region11: #{tpu_custom_call.1} parent=1 // pred_check_branch
      %17 = sbr.rel (0) target = $region13
    $region12: #{tpu_custom_call.1} parent=1 // pred_region
      _
    $region13: #{tpu_custom_call.1} parent=1 // pred_fallthru
      _
    // Predicated region
    $region14: #{tpu_custom_call.1} parent=1 // pred_check
      _
    $region15: #{tpu_custom_call.1} parent=1 // pred_check_branch
      %19 = sbr.rel (0) target = $region17
    $region16: #{tpu_custom_call.1} parent=1 // pred_region
      _
    $region17: #{tpu_custom_call.1} parent=1 // pred_fallthru
      _
    // Predicated region
    $region18: #{tpu_custom_call.1} parent=1 // pred_check
      _
    $region19: #{tpu_custom_call.1} parent=1 // pred_check_branch
      %21 = sbr.rel (0) target = $region21
    $region20: #{tpu_custom_call.1} parent=1 // pred_region
      _
    $region21: #{tpu_custom_call.1} parent=1 // pred_fallthru
      _
    // Predicated region
    $region22: #{tpu_custom_call.1} parent=1 // pred_check
      _
    $region23: #{tpu_custom_call.1} parent=1 // pred_check_branch
      %23 = sbr.rel (0) target = $region25
    $region24: #{tpu_custom_call.1} parent=1 // pred_region
      _
    $region25: #{tpu_custom_call.1} parent=1 // pred_fallthru
      _
    %v24 = vld [vmem:[%s0] sm:$0xff]
    %v25 = vld [vmem:[%s1] sm:$0xff]
    %v26 = vld [vmem:[%s1 + $0x8] sm:$0xff]
    %v27 = vld [vmem:[%s1 + $0x10] sm:$0xff]
    %v28 = vld [vmem:[%s1 + $0x18] sm:$0xff]
    %v29 = vld [vmem:[%s1 + $0x20] sm:$0xff]
    %v30 = vld [vmem:[%s1 + $0x28] sm:$0xff]
    %v31 = vld [vmem:[%s1 + $0x30] sm:$0xff]
    %v32 = vld [vmem:[%s1 + $0x38] sm:$0xff]
    %v33 = vld [vmem:[%s2] sm:$0x3]
    %v35 = vlaneseq
    %v36 = vshrl.u32 %v35, 7
    %v37 = vsub.s32 0, %v36
    %v38 = vrot.slane %v33, %v37
    %v39 = vlaneseq
    %v40 = vshrl.u32 %v39, 7
    %v41 = vsub.s32 1, %v40
    %v42 = vrot.slane %v33, %v41
    %vm45 = vcmask 261120
    %v47 = vsel %vm45, %v24, 0
    %49 = vmatprep.subr.mxu0 0.0
    %50 = vmatpush1.msra.mxu0 0.0
    %51 = vmatprep.subr.mxu0 0.0
    %52 = vmatpush1.msra.mxu0 0.0
    %53 = vmatprep.subr.mxu0 0.0
    %54 = vmatpush1.msra.mxu0 0.0
    %55 = vmatprep.subr.mxu0 0.0
    %56 = vmatpush1.msra.mxu0 0.0
    %57 = vmatprep.subr.mxu0 0.0
    %58 = vmatpush1.msra.mxu0 0.0
    %59 = vmatprep.subr.mxu0 0.0
    %60 = vmatpush1.msra.mxu0 0.0
    %61 = vmatprep.subr.mxu0 0.0
    %62 = vmatpush1.msra.mxu0 0.0
    %63 = vmatprep.subr.mxu0 0.0
    %64 = vmatpush1.msra.mxu0 0.0
    %65 = vmatprep.subr.mxu0 0.0
    %66 = vmatpush1.msra.mxu0 0.0
    %67 = vmatprep.subr.mxu0 0.0
    %68 = vmatpush1.msra.mxu0 0.0
    %69 = vmatprep.subr.mxu0 0.0
    %70 = vmatpush1.msra.mxu0 0.0
    %71 = vmatprep.subr.mxu0 0.0
    %72 = vmatpush1.msra.mxu0 0.0
    %73 = vmatprep.subr.mxu0 %v32
    %74 = vmatpush1.msra.mxu0 %v31
    %75 = vmatprep.subr.mxu0 %v30
    %76 = vmatpush1.msra.mxu0 %v29
    %77 = vmatprep.subr.mxu0 %v28
    %78 = vmatpush1.msra.mxu0 %v27
    %79 = vmatprep.subr.mxu0 %v26
    %80 = vmatpush1.msra.mxu0 %v25
    %81 = vmatprep.subr.mxu0 0.0
    %82 = vmatpush2.msra.mxu0 0.0
    %83 = vmatprep.subr.mxu0 0.0
    %84 = vmatpush2.msra.mxu0 0.0
    %85 = vmatprep.subr.mxu0 0.0
    %86 = vmatpush2.msra.mxu0 0.0
    %87 = vmatprep.subr.mxu0 0.0
    %88 = vmatpush2.msra.mxu0 0.0
    %89 = vmatprep.subr.mxu0 0.0
    %90 = vmatpush2.msra.mxu0 0.0
    %91 = vmatprep.subr.mxu0 0.0
    %92 = vmatpush2.msra.mxu0 0.0
    %93 = vmatprep.subr.mxu0 0.0
    %94 = vmatpush2.msra.mxu0 0.0
    %95 = vmatprep.subr.mxu0 0.0
    %96 = vmatpush2.msra.mxu0 0.0
    %97 = vmatprep.subr.mxu0 0.0
    %98 = vmatpush2.msra.mxu0 0.0
    %99 = vmatprep.subr.mxu0 0.0
    %100 = vmatpush2.msra.mxu0 0.0
    %101 = vmatprep.subr.mxu0 0.0
    %102 = vmatpush2.msra.mxu0 0.0
    %103 = vmatprep.subr.mxu0 0.0
    %104 = vmatpush2.msra.mxu0 0.0
    %105 = vmatprep.subr.mxu0 0.0
    %106 = vmatpush2.msra.mxu0 0.0
    %107 = vmatprep.subr.mxu0 0.0
    %108 = vmatpush2.msra.mxu0 0.0
    %109 = vmatprep.subr.mxu0 0.0
    %110 = vmatpush2.msra.mxu0 0.0
    %111 = vmatprep.subr.mxu0 0.0
    %112 = vmatpush2.msra.mxu0 0.0
    %113 = vmatprep.mubr.f32.mxu0 0.0
    %114 = vmatmul.mubr.f32.gmra.mxu0 %v47
    %v115 = vpop.f32.mrf.mxu0
    %v116 = vadd.f32 %v38, %v115
    %v117 = vpop.f32.mrf.mxu0
    %v118 = vadd.f32 %v42, %v117
    %119 = vdwg.mxu0
    %v120 = vmax.f32 %v116, 0.0
    %v121 = vmax.f32 %v118, 0.0
    %v122 = vld [vmem:[%s3] sm:$0xff]
    %v123 = vld [vmem:[%s3 + $0x8] sm:$0xff]
    %v124 = vld [vmem:[%s3 + $0x10] sm:$0xff]
    %v125 = vld [vmem:[%s3 + $0x18] sm:$0xff]
    %v126 = vld [vmem:[%s3 + $0x20] sm:$0xff]
    %v127 = vld [vmem:[%s3 + $0x28] sm:$0xff]
    %v128 = vld [vmem:[%s3 + $0x30] sm:$0xff]
    %v129 = vld [vmem:[%s3 + $0x38] sm:$0xff]
    %v130 = vld [vmem:[%s3 + $0x40] sm:$0xff]
    %v131 = vld [vmem:[%s3 + $0x48] sm:$0xff]
    %v132 = vld [vmem:[%s3 + $0x50] sm:$0xff]
    %v133 = vld [vmem:[%s3 + $0x58] sm:$0xff]
    %v134 = vld [vmem:[%s3 + $0x60] sm:$0xff]
    %v135 = vld [vmem:[%s3 + $0x68] sm:$0xff]
    %v136 = vld [vmem:[%s3 + $0x70] sm:$0xff]
    %v137 = vld [vmem:[%s3 + $0x78] sm:$0xff]
    %v138 = vld [vmem:[%s3 + $0x80] sm:$0xff]
    %v139 = vld [vmem:[%s3 + $0x88] sm:$0xff]
    %v140 = vld [vmem:[%s3 + $0x90] sm:$0xff]
    %v141 = vld [vmem:[%s3 + $0x98] sm:$0xff]
    %v142 = vld [vmem:[%s3 + $0xa0] sm:$0xff]
    %v143 = vld [vmem:[%s3 + $0xa8] sm:$0xff]
    %v144 = vld [vmem:[%s3 + $0xb0] sm:$0xff]
    %v145 = vld [vmem:[%s3 + $0xb8] sm:$0xff]
    %v146 = vld [vmem:[%s3 + $0xc0] sm:$0xff]
    %v147 = vld [vmem:[%s3 + $0xc8] sm:$0xff]
    %v148 = vld [vmem:[%s3 + $0xd0] sm:$0xff]
    %v149 = vld [vmem:[%s3 + $0xd8] sm:$0xff]
    %v150 = vld [vmem:[%s3 + $0xe0] sm:$0xff]
    %v151 = vld [vmem:[%s3 + $0xe8] sm:$0xff]
    %v152 = vld [vmem:[%s3 + $0xf0] sm:$0xff]
    %v153 = vld [vmem:[%s3 + $0xf8] sm:$0xff]
    %v154 = vld [vmem:[%s4] sm:$0x1]
    %v156 = vlaneseq
    %v157 = vshrl.u32 %v156, 7
    %v158 = vsub.s32 0, %v157
    %v159 = vrot.slane %v154, %v158
    %161 = vmatprep.subr.mxu0 0.0
    %162 = vmatpush1.msra.mxu0 %v137
    %163 = vmatprep.subr.mxu0 0.0
    %164 = vmatpush1.msra.mxu0 %v136
    %165 = vmatprep.subr.mxu0 0.0
    %166 = vmatpush1.msra.mxu0 %v135
    %167 = vmatprep.subr.mxu0 0.0
    %168 = vmatpush1.msra.mxu0 %v134
    %169 = vmatprep.subr.mxu0 0.0
    %170 = vmatpush1.msra.mxu0 %v133
    %171 = vmatprep.subr.mxu0 0.0
    %172 = vmatpush1.msra.mxu0 %v132
    %173 = vmatprep.subr.mxu0 0.0
    %174 = vmatpush1.msra.mxu0 %v131
    %175 = vmatprep.subr.mxu0 0.0
    %176 = vmatpush1.msra.mxu0 %v130
    %177 = vmatprep.subr.mxu0 0.0
    %178 = vmatpush1.msra.mxu0 %v129
    %179 = vmatprep.subr.mxu0 0.0
    %180 = vmatpush1.msra.mxu0 %v128
    %181 = vmatprep.subr.mxu0 0.0
    %182 = vmatpush1.msra.mxu0 %v127
    %183 = vmatprep.subr.mxu0 0.0
    %184 = vmatpush1.msra.mxu0 %v126
    %185 = vmatprep.subr.mxu0 0.0
    %186 = vmatpush1.msra.mxu0 %v125
    %187 = vmatprep.subr.mxu0 0.0
    %188 = vmatpush1.msra.mxu0 %v124
    %189 = vmatprep.subr.mxu0 0.0
    %190 = vmatpush1.msra.mxu0 %v123
    %191 = vmatprep.subr.mxu0 0.0
    %192 = vmatpush1.msra.mxu0 %v122
    %193 = vmatprep.subr.mxu0 0.0
    %194 = vmatpush2.msra.mxu0 %v153
    %195 = vmatprep.subr.mxu0 0.0
    %196 = vmatpush2.msra.mxu0 %v152
    %197 = vmatprep.subr.mxu0 0.0
    %198 = vmatpush2.msra.mxu0 %v151
    %199 = vmatprep.subr.mxu0 0.0
    %200 = vmatpush2.msra.mxu0 %v150
    %201 = vmatprep.subr.mxu0 0.0
    %202 = vmatpush2.msra.mxu0 %v149
    %203 = vmatprep.subr.mxu0 0.0
    %204 = vmatpush2.msra.mxu0 %v148
    %205 = vmatprep.subr.mxu0 0.0
    %206 = vmatpush2.msra.mxu0 %v147
    %207 = vmatprep.subr.mxu0 0.0
    %208 = vmatpush2.msra.mxu0 %v146
    %209 = vmatprep.subr.mxu0 0.0
    %210 = vmatpush2.msra.mxu0 %v145
    %211 = vmatprep.subr.mxu0 0.0
    %212 = vmatpush2.msra.mxu0 %v144
    %213 = vmatprep.subr.mxu0 0.0
    %214 = vmatpush2.msra.mxu0 %v143
    %215 = vmatprep.subr.mxu0 0.0
    %216 = vmatpush2.msra.mxu0 %v142
    %217 = vmatprep.subr.mxu0 0.0
    %218 = vmatpush2.msra.mxu0 %v141
    %219 = vmatprep.subr.mxu0 0.0
    %220 = vmatpush2.msra.mxu0 %v140
    %221 = vmatprep.subr.mxu0 0.0
    %222 = vmatpush2.msra.mxu0 %v139
    %223 = vmatprep.subr.mxu0 0.0
    %224 = vmatpush2.msra.mxu0 %v138
    %225 = vmatprep.mubr.f32.mxu0 %v121
    %226 = vmatmul.mubr.f32.gmra.mxu0 %v120
    %v227 = vpop.f32.mrf.mxu0
    %v228 = vadd.f32 %v159, %v227
    %v229 = vpop.f32.mrf.mxu0
    %230 = vdwg.mxu0
    %v231 = vmax.f32 %v228, 0.0
    %vm232 = vcmp.ne.f32.partialorder %v228, %v228
    %v233 = vadd.f32 %v228, 0.0
    %v234 = vand.u32 2147483647, %v228
    %v235 = vsub.f32 0.0, %v234
    %v236 = vmul.f32 %v235, 1.442695
    %v237 = vpow.pop %v236
    %v238 = vadd.f32 %v237, 1.0
    %v239 = vlog2.pop %v238
    %v240 = vmul.f32 %v239, 0.6931472
    %v241 = vmul.f32 -0.5, %v237
    %v242 = vadd.f32 %v241, 1.0
    %v243 = vmul.f32 %v242, %v237
    %v244 = vand.u32 2147483647, %v237
    %vm245 = vcmp.lt.f32.partialorder %v244, 0.0004427343
    %v246 = vsel %vm245, %v243, %v240
    %v247 = vadd.f32 %v231, %v246
    %v248 = vsel %vm232, %v233, %v247
    %v249 = vadd.f32 %v248, 1.0
    %v250 = vld [vmem:[%s5] sm:$0x1]
    %v252 = vlaneseq
    %v253 = vshrl.u32 %v252, 7
    %v254 = vsub.s32 0, %v253
    %v255 = vrot.slane %v250, %v254
    %v257 = vmul.f32 %v255, %v249
    %v258 = vsub.f32 1.0, %v250
    %v260 = vlaneseq
    %v261 = vshrl.u32 %v260, 7
    %v262 = vsub.s32 0, %v261
    %v263 = vrot.slane %v258, %v262
    %v265 = vmul.f32 %v263, %v228
    %v266 = vadd.f32 %v257, %v265
    %vm267 = vcmask 64512
    %268 = vst.msk [vmem:[#allocation2] sm:$0xff] %vm267, %v266
    // Predicated region
    $region26: #{tpu_custom_call.1} parent=1 // pred_check
      _
    $region27: #{tpu_custom_call.1} parent=1 // pred_check_branch
      %270 = sbr.rel (0) target = $region29
    $region28: #{tpu_custom_call.1} parent=1 // pred_region
      %s272 = ssub.s32 128, 128
      %273 = vsyncadd [#allocation3], %s272
      %s275 = sshll.u32 [#allocation2], 4
      %s276 = int_to_ptr.vmem [resolvable:$true] %s275
      %278 = dma.vmem_to_hbm [thread:$0]  %s276, 128, %s6, [#allocation3]
    $region29: #{tpu_custom_call.1} parent=1 // pred_fallthru
      _
    // Predicated region
    $region30: #{tpu_custom_call.1} parent=1 // pred_check
      _
    $region31: #{tpu_custom_call.1} parent=1 // pred_check_branch
      %280 = sbr.rel (0) target = $region33
    $region32: #{tpu_custom_call.1} parent=1 // pred_region
      %281 = dma.done [#allocation3], 128
    $region33: #{tpu_custom_call.1} parent=1 // pred_fallthru
      _
    %282 = vsyncpa [#allocation3], 1

</llo_original>
